<compile_context>
chip_gen: v5e
topology: v5e:2x2
jax: 0.10.0
libtpu: 0.0.40
codegen_flags: <defaults>
</compile_context>

<pallas_src>
import functools

import jax
import jax.numpy as jnp
import numpy as np
from jax.experimental import pallas as pl
from jax.experimental.pallas import tpu as pltpu

_LANE = 128
_MAX_BLOCK_BYTES = 4 << 20          # per-block cap (v7x VMEM safety)
_VMEM_LIMIT = 32 * 1024 * 1024      # raises v5e's 16 MiB default; default on v6e/v7x


# ----------------------------------------------------------------------------- kernels
def _fq_per_channel_kernel(x_ref, s_ref, z_ref, o_ref, *, qmin, qmax,
                           compensate_zp, use_reciprocal):
    x = x_ref[...].astype(jnp.float32)                 # (bc,bf) or (1,br,bl)
    s = s_ref[...]                                     # (bc,1) or (1,1), f32
    s = jnp.where(s > 0.0, s, jnp.float32(1.0))        # guard ragged/padded scale rows
    if use_reciprocal:
        q = jnp.round(x * (1.0 / s))                   # per-row reciprocal, not per-elem
    else:
        q = jnp.round(x / s)                           # bit-exact with torch.round(x/s)
    lo = jnp.float32(qmin)
    hi = jnp.float32(qmax)
    if compensate_zp:
        z = z_ref[...]
        lo = lo - z                                    # folded clip bounds:
        hi = hi - z                                    # clip(q+z,a,b)-z == clip(q,a-z,b-z)
    o_ref[...] = (jnp.clip(q, lo, hi) * s).astype(o_ref.dtype)


def _fq_per_tensor_kernel(s_ref, z_ref, x_ref, o_ref, *, qmin, qmax,
                          compensate_zp, use_reciprocal):
    x = x_ref[...].astype(jnp.float32)                 # (br,bl)
    s = s_ref[0]                                       # SMEM scalar
    if use_reciprocal:
        q = jnp.round(x * (jnp.float32(1.0) / s))      # one scalar divide per tile
    else:
        q = jnp.round(x / s)
    lo = jnp.float32(qmin)
    hi = jnp.float32(qmax)
    if compensate_zp:
        z = z_ref[0]
        lo = lo - z
        hi = hi - z
    o_ref[...] = (jnp.clip(q, lo, hi) * s).astype(o_ref.dtype)


# ----------------------------------------------------------------------------- helpers
def quant_range(precision, symmetric, unsigned, narrow_range):
    """Replicates FakeQuantizer.quant_min / quant_max / narrow properties."""
    narrow = bool(narrow_range and (not unsigned) and symmetric)
    if narrow:
        qmin = -(1 << (precision - 1)) + 1
        qmax = (1 << precision) - 1 + qmin - 1
    else:
        qmin = 0 if unsigned else -(1 << (precision - 1))
        qmax = (1 << precision) - 1 + qmin
    return qmin, qmax


def _round_up(x, m):
    return ((x + m - 1) // m) * m


def _sublane_multiple(itemsize):
    # f32 -> 8, bf16/f16 -> 16, int8/fp8 -> 32 rows per packed vreg
    return 8 * max(1, 4 // int(itemsize))


def _pick_blocks_2d(rows, lanes, itemsize, byte_budget, sub):
    """Pick (br, bl): bl a multiple of 128 (possibly rounded above a non-128 extent),
    br a multiple of `sub` (or the full extent), with br*bl*itemsize ~<= byte budget."""
    budget = int(min(max(byte_budget, 128 * 1024), _MAX_BLOCK_BYTES))
    target_elems = max(budget // itemsize, sub * _LANE)

    if lanes % _LANE == 0:
        lane_cap = max(_LANE, min(4096, ((target_elems // sub) // _LANE) * _LANE))
        bl = lanes if lanes <= lane_cap else lane_cap
    else:
        # round UP to a multiple of 128 -> single ragged block, stores stay lane-dense
        bl = min(_round_up(lanes, _LANE), 4096)

    br = max(sub, ((target_elems // bl) // sub) * sub)
    if br >= rows:
        br = rows                                      # full extent is always legal
    return br, bl


def _per_tensor_slab(x, sub):
    """Flatten x into a lane-dense (rows, lanes) slab.  If the element count is not a
    multiple of 128, pad up to a full (sub*128) multiple (sliced off afterwards)."""
    n = int(x.size)
    flat = x.reshape(-1)
    for lanes in (2048, 1024, 512, 256, 128):
        if n % lanes == 0 and n // lanes >= sub:
            return flat.reshape(n // lanes, lanes), False
    if n % _LANE == 0:
        return flat.reshape(n // _LANE, _LANE), False
    padded_n = _round_up(n, sub * _LANE)
    flat = jnp.pad(flat, (0, padded_n - n))
    return flat.reshape(padded_n // _LANE, _LANE), True


def _fake_quantize_jnp(x, step_size, zero_point, qmin, qmax, per_channel, compensate):
    """Pure-jnp fake quantization (torch-form).  Used for the small-tensor early-out
    and as the correctness reference."""
    xf = x.astype(jnp.float32)
    s = step_size.astype(jnp.float32)
    z = zero_point.astype(jnp.float32)
    if per_channel:
        bshape = (-1,) + (1,) * (x.ndim - 1)
        s = s.reshape(bshape)
        z = z.reshape(bshape)
    q = jnp.round(xf / s)
    if compensate:
        q = jnp.clip(q + z, qmin, qmax) - z
    else:
        q = jnp.clip(q, qmin, qmax)
    return (q * s).astype(x.dtype)


# ----------------------------------------------------------------------------- wrapper
def fake_quantizer_forward(
    x,
    step_size,
    zero_point,
    *,
    quant_min,
    quant_max,
    per_channel,
    compensate_zero_point=True,   # == (not is_zero_point_folded); False for symmetric
    enabled=True,
    byte_budget=2 << 20,          # ~2 MiB per block, dtype-aware (capped at 4 MiB)
    block_rows=None,              # optional manual override (multiple of sublane pack)
    block_lanes=None,             # optional manual override (multiple of 128)
    use_reciprocal=False,         # v7x micro-opt; not bit-exact at round-half ties
    min_pallas_bytes=64 * 1024,   # below this, use the fused jnp path (launch overhead)
    validate_step_size=False,     # opt-in: forces device->host sync, breaks under jit
):
    if not enabled:
        return x

    if validate_step_size:
        # The PyTorch module runs this every forward; opt-in here because it forces a
        # blocking host sync (and a ConcretizationTypeError under jax.jit).
        if float(jnp.min(step_size)) <= 0.0:
            raise ValueError("Step_size must be positive")

    orig_shape = x.shape
    orig_dtype = x.dtype
    itemsize = int(jnp.dtype(orig_dtype).itemsize)
    sub = _sublane_multiple(itemsize)

    if per_channel:
        C = int(orig_shape[0])
        if int(step_size.shape[0]) != C:
            raise ValueError(
                f"channel_size(={int(step_size.shape[0])}) value must be the same as "
                f"the first dimension of the input tensor (={C})."
            )

    # -- small-tensor early-out: per-call + per-step overhead dominates tiny tensors
    if int(x.size) * itemsize < min_pallas_bytes:
        return _fake_quantize_jnp(x, step_size, zero_point, quant_min, quant_max,
                                  per_channel, compensate_zero_point)

    cparams = lambda ndims: pltpu.CompilerParams(
        dimension_semantics=("parallel",) * ndims,
        vmem_limit_bytes=_VMEM_LIMIT,
    )

    if per_channel:
        C = int(orig_shape[0])
        F = int(np.prod(orig_shape[1:])) if len(orig_shape) > 1 else 1
        s = step_size.reshape(C, 1).astype(jnp.float32)     # tiny
        z = zero_point.reshape(C, 1).astype(jnp.float32)

        kernel = functools.partial(
            _fq_per_channel_kernel, qmin=quant_min, qmax=quant_max,
            compensate_zp=compensate_zero_point, use_reciprocal=use_reciprocal)

        # ---- small-C path: retile to (C, R, L) so vregs are fully occupied even
        #      when the channel count is below the sublane packing factor.
        if C < sub and F % _LANE == 0 and F // _LANE >= sub:
            L = _LANE
            for cand in (2048, 1024, 512, 256, 128):
                if F % cand == 0 and F // cand >= sub:
                    L = cand
                    break
            R = F // L
            x3 = x.reshape(C, R, L)                          # view: no HBM traffic
            br, bl = _pick_blocks_2d(R, L, itemsize, byte_budget, sub)
            if block_rows is not None:
                br = min(block_rows, R)
            if block_lanes is not None:
                bl = min(block_lanes, L)
            grid = (C, pl.cdiv(R, br), pl.cdiv(L, bl))
            out = pl.pallas_call(
                kernel,
                out_shape=jax.ShapeDtypeStruct((C, R, L), orig_dtype),
                grid=grid,
                in_specs=[
                    pl.BlockSpec((1, br, bl), lambda c, r, l: (c, r, l)),
                    pl.BlockSpec((1, 1), lambda c, r, l: (c, 0)),
                    pl.BlockSpec((1, 1), lambda c, r, l: (c, 0)),
                ],
                out_specs=pl.BlockSpec((1, br, bl), lambda c, r, l: (c, r, l)),
                compiler_params=cparams(3),
            )(x3, s, z)
            return out.reshape(orig_shape)

        # ---- general (C, F) path
        x2 = x.reshape(C, F)                                 # view: no HBM traffic
        br, bl = _pick_blocks_2d(C, F, itemsize, byte_budget, sub)
        if block_rows is not None:
            br = min(block_rows, C)
        if block_lanes is not None:
            bl = block_lanes
        grid = (pl.cdiv(C, br), pl.cdiv(F, bl))
        out = pl.pallas_call(
            kernel,
            out_shape=jax.ShapeDtypeStruct((C, F), orig_dtype),
            grid=grid,
            in_specs=[
                pl.BlockSpec((br, bl), lambda i, j: (i, j)),
                pl.BlockSpec((br, 1), lambda i, j: (i, 0)),
                pl.BlockSpec((br, 1), lambda i, j: (i, 0)),
            ],
            out_specs=pl.BlockSpec((br, bl), lambda i, j: (i, j)),
            compiler_params=cparams(2),
        )(x2, s, z)
        return out.reshape(orig_shape)

    # ---- per-tensor: lane-dense slab + SMEM scalars
    n = int(x.size)
    x2, padded = _per_tensor_slab(x, sub)
    rows, lanes = x2.shape
    s = jnp.reshape(step_size, (1,)).astype(jnp.float32)
    z = jnp.reshape(zero_point, (1,)).astype(jnp.float32)

    br, bl = _pick_blocks_2d(rows, lanes, itemsize, byte_budget, sub)
    if block_rows is not None:
        br = min(block_rows, rows)
    if block_lanes is not None:
        bl = min(block_lanes, lanes)
    grid = (pl.cdiv(rows, br), pl.cdiv(lanes, bl))

    kernel = functools.partial(
        _fq_per_tensor_kernel, qmin=quant_min, qmax=quant_max,
        compensate_zp=compensate_zero_point, use_reciprocal=use_reciprocal)

    out = pl.pallas_call(
        kernel,
        out_shape=jax.ShapeDtypeStruct((rows, lanes), orig_dtype),
        grid=grid,
        in_specs=[
            pl.BlockSpec(memory_space=pltpu.MemorySpace.SMEM),   # step_size scalar
            pl.BlockSpec(memory_space=pltpu.MemorySpace.SMEM),   # zero_point scalar
            pl.BlockSpec((br, bl), lambda i, j: (i, j)),
        ],
        out_specs=pl.BlockSpec((br, bl), lambda i, j: (i, j)),
        compiler_params=cparams(2),
    )(s, z, x2)

    if padded:
        out = out.reshape(-1)[:n]
    return out.reshape(orig_shape)


# ----------------------------------------------------------------------------- main
if __name__ == "__main__":
    key = jax.random.PRNGKey(0)
    k1, k2, k3, k4, k5, k6 = jax.random.split(key, 6)

    qmin_s, qmax_s = quant_range(8, symmetric=True, unsigned=False, narrow_range=False)
    qmin_u, qmax_u = quant_range(8, symmetric=False, unsigned=True, narrow_range=False)

    # --- case 1: per-channel symmetric signed 8-bit (typical conv-weight quantizer)
    C = 16
    w = jax.random.normal(k1, (C, 4, 8, 8), dtype=jnp.float32)
    step_pc = 0.02 * (1.0 + jnp.arange(C, dtype=jnp.float32) / C)
    zp_pc = jnp.zeros((C,), jnp.float32)
    out = fake_quantizer_forward(
        w, step_pc, zp_pc, quant_min=qmin_s, quant_max=qmax_s,
        per_channel=True, compensate_zero_point=False, min_pallas_bytes=0)
    out = jax.block_until_ready(out)
    ref = _fake_quantize_jnp(w, step_pc, zp_pc, qmin_s, qmax_s, True, False)
    np.testing.assert_allclose(np.asarray(out), np.asarray(ref), rtol=1e-6, atol=1e-6)

    # --- case 1b: small-C per-channel (C=4 < sublane pack) -> (C, R, L) retiled path
    w_sc = jax.random.normal(k2, (4, 4, 16, 32), dtype=jnp.float32)   # F = 2048
    step_sc = jnp.array([0.01, 0.02, 0.03, 0.04], jnp.float32)
    zp_sc = jnp.zeros((4,), jnp.float32)
    out_sc = fake_quantizer_forward(
        w_sc, step_sc, zp_sc, quant_min=qmin_s, quant_max=qmax_s,
        per_channel=True, compensate_zero_point=False, min_pallas_bytes=0)
    out_sc = jax.block_until_ready(out_sc)
    ref_sc = _fake_quantize_jnp(w_sc, step_sc, zp_sc, qmin_s, qmax_s, True, False)
    np.testing.assert_allclose(np.asarray(out_sc), np.asarray(ref_sc), rtol=1e-6, atol=1e-6)

    # --- case 1c: odd F (3x5x5) + ragged channel blocks (block_rows=8 over C=12)
    w2 = jax.random.normal(k3, (12, 3, 5, 5), dtype=jnp.float32)
    step2 = jnp.full((12,), 0.03, jnp.float32)
    zp2 = jnp.zeros((12,), jnp.float32)
    out2 = fake_quantizer_forward(
        w2, step2, zp2, quant_min=qmin_s, quant_max=qmax_s,
        per_channel=True, compensate_zero_point=False,
        min_pallas_bytes=0, block_rows=8)
    out2 = jax.block_until_ready(out2)
    ref2 = _fake_quantize_jnp(w2, step2, zp2, qmin_s, qmax_s, True, False)
    np.testing.assert_allclose(np.asarray(out2), np.asarray(ref2), rtol=1e-6, atol=1e-6)

    # --- case 2: per-tensor asymmetric unsigned 8-bit (typical activation quantizer)
    x = jax.random.normal(k4, (2, 4, 16, 16), dtype=jnp.float32)
    step_pt = jnp.full((1,), 0.01, jnp.float32)
    zp_pt = jnp.full((1,), 3.0, jnp.float32)
    out_pt = fake_quantizer_forward(
        x, step_pt, zp_pt, quant_min=qmin_u, quant_max=qmax_u,
        per_channel=False, compensate_zero_point=True, min_pallas_bytes=0)
    out_pt = jax.block_until_ready(out_pt)
    ref_pt = _fake_quantize_jnp(x, step_pt, zp_pt, qmin_u, qmax_u, False, True)
    np.testing.assert_allclose(np.asarray(out_pt), np.asarray(ref_pt), rtol=1e-6, atol=1e-6)

    # --- case 2b: reciprocal variant (v7x micro-opt; not bit-exact at ties)
    out_rcp = fake_quantizer_forward(
        x, step_pt, zp_pt, quant_min=qmin_u, quant_max=qmax_u,
        per_channel=False, compensate_zero_point=True,
        use_reciprocal=True, min_pallas_bytes=0)
    out_rcp = jax.block_until_ready(out_rcp)
    np.testing.assert_allclose(np.asarray(out_rcp), np.asarray(ref_pt), atol=0.011)

    # --- case 3: native bf16 I/O, element count not a multiple of 128 (padded slab)
    x3 = jax.random.normal(k5, (2, 5, 7, 9), dtype=jnp.bfloat16)
    step3 = jnp.full((1,), 0.05, jnp.float32)
    zp3 = jnp.full((1,), 2.0, jnp.float32)
    out3 = fake_quantizer_forward(
        x3, step3, zp3, quant_min=qmin_u, quant_max=qmax_u,
        per_channel=False, compensate_zero_point=True, min_pallas_bytes=0)
    out3 = jax.block_until_ready(out3)
    assert out3.dtype == jnp.bfloat16 and out3.shape == x3.shape
    ref3 = _fake_quantize_jnp(x3, step3, zp3, qmin_u, qmax_u, False, True)
    np.testing.assert_allclose(np.asarray(out3.astype(jnp.float32)),
                               np.asarray(ref3.astype(jnp.float32)),
                               rtol=1e-2, atol=1e-2)

    # --- case 4: larger (1 MiB) activation through the default byte-budget path
    x4 = jax.random.normal(k6, (8, 128, 256), dtype=jnp.float32)
    out4 = fake_quantizer_forward(
        x4, step_pt, zp_pt, quant_min=qmin_u, quant_max=qmax_u,
        per_channel=False, compensate_zero_point=True)
    out4 = jax.block_until_ready(out4)
    ref4 = _fake_quantize_jnp(x4, step_pt, zp_pt, qmin_u, qmax_u, False, True)
    np.testing.assert_allclose(np.asarray(out4), np.asarray(ref4), rtol=1e-6, atol=1e-6)

    # --- case 5: disabled quantizer is the identity
    out_dis = fake_quantizer_forward(
        x, step_pt, zp_pt, quant_min=qmin_u, quant_max=qmax_u,
        per_channel=False, enabled=False)
    np.testing.assert_array_equal(np.asarray(out_dis), np.asarray(x))

    # TODO(synk): calibrator / state_dict / QAT backward (LSQ gradient scaling via
    # grad_scale, learn_zero_point) are training/serialization machinery with no
    # forward-pass Pallas equivalent.
    print("KERNEL_OK")
</pallas_src>

<mosaic_0001>
module attributes {stable_mosaic.version = 11 : i64} {
  func.func @_fq_per_channel_kernel(%arg0: i32, %arg1: i32, %arg2: memref<16x256xf32, #tpu.memory_space<vmem>>, %arg3: memref<16x1xf32, #tpu.memory_space<vmem>>, %arg4: memref<16x1xf32, #tpu.memory_space<vmem>>, %arg5: memref<16x256xf32, #tpu.memory_space<vmem>>) attributes {dimension_semantics = [#tpu.dimension_semantics<parallel>, #tpu.dimension_semantics<parallel>], iteration_bounds = array<i64: 1, 1>, scalar_prefetch = 0 : i64, scratch_operands = 0 : i64, tpu.core_type = #tpu.core_type<tc>, window_params = [{transform_indices = @transform_0, window_bounds = array<i64: 16, 256>}, {transform_indices = @transform_1, window_bounds = array<i64: 16, 1>}, {transform_indices = @transform_2, window_bounds = array<i64: 16, 1>}, {transform_indices = @transform_3, window_bounds = array<i64: 16, 256>}]} {
    %c0 = arith.constant 0 : index
    %c0_0 = arith.constant 0 : index
    %0 = vector.load %arg2[%c0, %c0_0] : memref<16x256xf32, #tpu.memory_space<vmem>>, vector<16x256xf32>
    %c0_1 = arith.constant 0 : index
    %c0_2 = arith.constant 0 : index
    %1 = vector.load %arg3[%c0_1, %c0_2] : memref<16x1xf32, #tpu.memory_space<vmem>>, vector<16x1xf32>
    %cst = arith.constant 0.000000e+00 : f32
    %2 = vector.broadcast %cst : f32 to vector<16x1xf32>
    %3 = arith.cmpf ogt, %1, %2 : vector<16x1xf32>
    %cst_3 = arith.constant 1.000000e+00 : f32
    %4 = vector.broadcast %cst_3 : f32 to vector<16x1xf32>
    %5 = arith.select %3, %1, %4 : vector<16x1xi1>, vector<16x1xf32>
    %6 = vector.broadcast %5 : vector<16x1xf32> to vector<16x256xf32>
    %7 = arith.divf %0, %6 : vector<16x256xf32>
    %8 = math.roundeven %7 : vector<16x256xf32>
    %cst_4 = arith.constant -1.280000e+02 : f32
    %cst_5 = arith.constant 1.270000e+02 : f32
    %9 = vector.broadcast %cst_4 : f32 to vector<16x256xf32>
    %10 = arith.maximumf %9, %8 : vector<16x256xf32>
    %11 = vector.broadcast %cst_5 : f32 to vector<16x256xf32>
    %12 = arith.minimumf %11, %10 : vector<16x256xf32>
    %13 = vector.broadcast %5 : vector<16x1xf32> to vector<16x256xf32>
    %14 = arith.mulf %12, %13 : vector<16x256xf32>
    %c0_6 = arith.constant 0 : index
    %c0_7 = arith.constant 0 : index
    %15 = vector.load %arg5[%c0_6, %c0_7] : memref<16x256xf32, #tpu.memory_space<vmem>>, vector<16x256xf32>
    tpu.vector_store %arg5[%c0_6, %c0_7], %14 {strides = array<i32>} : memref<16x256xf32, #tpu.memory_space<vmem>>, vector<16x256xf32>,
    return
  }
  func.func @transform_0(%arg0: i32, %arg1: i32) -> (i32, i32) {
    %c0_i32 = arith.constant 0 : i32
    return %arg0, %arg1 : i32, i32
  }
  func.func @transform_1(%arg0: i32, %arg1: i32) -> (i32, i32) {
    %c0_i32 = arith.constant 0 : i32
    %c0_i32_0 = arith.constant 0 : i32
    return %arg0, %c0_i32 : i32, i32
  }
  func.func @transform_2(%arg0: i32, %arg1: i32) -> (i32, i32) {
    %c0_i32 = arith.constant 0 : i32
    %c0_i32_0 = arith.constant 0 : i32
    return %arg0, %c0_i32 : i32, i32
  }
  func.func @transform_3(%arg0: i32, %arg1: i32) -> (i32, i32) {
    %c0_i32 = arith.constant 0 : i32
    return %arg0, %arg1 : i32, i32
  }
}

</mosaic_0001>

<llo_original>
// kernel: tpu_custom_call.1
$region0: #{tpu_custom_call.1}
  #allocation0 [shape = 'u32[]', space=smem, size = 0x4, offset = 0x4, fixed_abs, tag = 'smem constant byte address 0x4 - core index']
  #allocation1 [shape = 'u32[72,128]{1,0:T(1,128)}', space=vmem, size = 0x9000, scoped, tag = 'internal scratch']
  %s0 = inlined_call_operand.vmem [shape: f32[16,256], index: 0, kind: input, shape index: {}]
  %s1 = inlined_call_operand.vmem [shape: f32[16,1], index: 1, kind: input, shape index: {}]
  %s2 = inlined_call_operand.vmem [shape: f32[16,1], index: 2, kind: input, shape index: {}]
  %s3 = inlined_call_operand.hbm [shape: f32[16,256], index: 3, kind: output, shape index: {}]
  %s4 = sld [smem:[#allocation0]]
  $region22: #{tpu_custom_call.1} parent=0
    _
  %s6 = ssub.s32 1, %s4
  %s7 = scalar_select 0, %s6, %s4
  $region1: #{tpu_custom_call.1} parent=0
    #allocation2 [shape = 'u8[16384]{0}', space=vmem, size = 0x4000, scoped, tag = 'output window, operand 0, single buffered']
    #allocation3 [shape = 's32[1]{0}', space=sflag, size = 0x4, scoped, tag = 'scoped memory for tpu_custom_call.1']
    %8 = vsyncpa [#allocation3], 0
    // Predicated region
    $region2: #{tpu_custom_call.1} parent=1 // pred_check
      _
    $region3: #{tpu_custom_call.1} parent=1 // pred_check_branch
      %10 = sbr.rel (0) target = $region5
    $region4: #{tpu_custom_call.1} parent=1 // pred_region
      _
    $region5: #{tpu_custom_call.1} parent=1 // pred_fallthru
      _
    // Predicated region
    $region6: #{tpu_custom_call.1} parent=1 // pred_check
      _
    $region7: #{tpu_custom_call.1} parent=1 // pred_check_branch
      %12 = sbr.rel (0) target = $region9
    $region8: #{tpu_custom_call.1} parent=1 // pred_region
      _
    $region9: #{tpu_custom_call.1} parent=1 // pred_fallthru
      _
    // Predicated region
    $region10: #{tpu_custom_call.1} parent=1 // pred_check
      _
    $region11: #{tpu_custom_call.1} parent=1 // pred_check_branch
      %14 = sbr.rel (0) target = $region13
    $region12: #{tpu_custom_call.1} parent=1 // pred_region
      _
    $region13: #{tpu_custom_call.1} parent=1 // pred_fallthru
      _
    %v15 = vld [vmem:[%s0] sm:$0xff]
    %v16 = vld [vmem:[%s0 + $0x8] sm:$0xff]
    %v17 = vld [vmem:[%s0 + $0x10] sm:$0xff]
    %v18 = vld [vmem:[%s0 + $0x18] sm:$0xff]
    %v19 = vld [vmem:[%s1] sm:$0xff]
    %v20 = vld [vmem:[%s1 + $0x8] sm:$0xff]
    %vm21 = vcmp.gt.f32.partialorder %v19, 0.0
    %vm22 = vcmp.gt.f32.partialorder %v20, 0.0
    %v23 = vsel %vm21, %v19, 1.0
    %v24 = vsel %vm22, %v20, 1.0
    %26 = vset.pattern.permute.xlu0 0
    %27 = vperm.xlu0 %26, %v23
    %v28 = vpop.permute.xlu0 %27
    %31 = vset.pattern.permute.xlu0 0
    %32 = vperm.xlu0 %31, %v24
    %v33 = vpop.permute.xlu0 %32
    %v35 = vrcp.pop %v28
    %v36 = vmul.f32 %v28, %v35
    %v37 = vsub.f32 1.0, %v36
    %v38 = vmul.f32 %v35, %v37
    %v39 = vadd.f32 %v35, %v38
    %vm40 = vweird.f32 %v28
    %vm41 = vweird.f32 %v35
    %vm42 = vmor %vm40, %vm41
    %v43 = vsel %vm42, %v35, %v39
    %v44 = vand.u32 2147483647, %v28
    %vm45 = vcmp.eq.f32.partialorder %v44, 8.507059e+37
    %v46 = vand.u32 %v28, 2147483648
    %v47 = vor.u32 1.1754944e-38, %v46
    %v48 = vsel %vm45, %v47, %v43
    %v49 = vmul.f32 %v15, %v48
    %v50 = vmul.f32 %v16, %v48
    %v51 = vrcp.pop %v33
    %v52 = vmul.f32 %v33, %v51
    %v53 = vsub.f32 1.0, %v52
    %v54 = vmul.f32 %v51, %v53
    %v55 = vadd.f32 %v51, %v54
    %vm56 = vweird.f32 %v33
    %vm57 = vweird.f32 %v51
    %vm58 = vmor %vm56, %vm57
    %v59 = vsel %vm58, %v51, %v55
    %v60 = vand.u32 2147483647, %v33
    %vm61 = vcmp.eq.f32.partialorder %v60, 8.507059e+37
    %v62 = vand.u32 %v33, 2147483648
    %v63 = vor.u32 1.1754944e-38, %v62
    %v64 = vsel %vm61, %v63, %v59
    %v65 = vmul.f32 %v17, %v64
    %v66 = vmul.f32 %v18, %v64
    %v67 = vround.ne.pseudo %v49
    %v68 = vround.ne.pseudo %v50
    %v69 = vround.ne.pseudo %v65
    %v70 = vround.ne.pseudo %v66
    %v71 = vmax.f32 %v67, -128.0
    %v72 = vmax.f32 %v68, -128.0
    %v73 = vmax.f32 %v69, -128.0
    %v74 = vmax.f32 %v70, -128.0
    %v75 = vmin.f32 %v71, 127.0
    %v76 = vmin.f32 %v72, 127.0
    %v77 = vmin.f32 %v73, 127.0
    %v78 = vmin.f32 %v74, 127.0
    %v79 = vmul.f32 %v75, %v28
    %v80 = vmul.f32 %v76, %v28
    %v81 = vmul.f32 %v77, %v33
    %v82 = vmul.f32 %v78, %v33
    %83 = vst [vmem:[#allocation2] sm:$0xff] %v79
    %84 = vst [vmem:[#allocation2 + $0x8] sm:$0xff] %v80
    %85 = vst [vmem:[#allocation2 + $0x10] sm:$0xff] %v81
    %86 = vst [vmem:[#allocation2 + $0x18] sm:$0xff] %v82
    // Predicated region
    $region14: #{tpu_custom_call.1} parent=1 // pred_check
      _
    $region15: #{tpu_custom_call.1} parent=1 // pred_check_branch
      %88 = sbr.rel (0) target = $region17
    $region16: #{tpu_custom_call.1} parent=1 // pred_region
      %90 = vsyncadd [#allocation3], 0
      %s91 = sshll.u32 [#allocation2], 4
      %s92 = int_to_ptr.vmem [resolvable:$true] %s91
      %s93 = sshll.u32 %s3, 4
      %s94 = int_to_ptr.hbm [resolvable:$true] %s93
      %99 = dma.vmem_to_hbm [thread:$0]  %s92, 512, %s94, [#allocation3], 256, 256, 16
    $region17: #{tpu_custom_call.1} parent=1 // pred_fallthru
      _
    // Predicated region
    $region18: #{tpu_custom_call.1} parent=1 // pred_check
      _
    $region19: #{tpu_custom_call.1} parent=1 // pred_check_branch
      %101 = sbr.rel (0) target = $region21
    $region20: #{tpu_custom_call.1} parent=1 // pred_region
      %103 = dma.done [#allocation3], 512
    $region21: #{tpu_custom_call.1} parent=1 // pred_fallthru
      _
    %104 = vsyncpa [#allocation3], 1

</llo_original>
